<compile_context>
chip_gen: v7x
topology: tpu7x:2x2x1
jax: 0.10.0
libtpu: 0.0.40
codegen_flags: <defaults>
</compile_context>

<pallas_src>
import jax
import jax.numpy as jnp
from jax.experimental import pallas as pl
from jax.experimental.pallas import tpu as pltpu


def ffn_kernel(x_ref, emb_ref, w1t_ref, w2t_ref, o_ref):
    """One grid step == one (batch, seq-tile) block. NCL layout, seq = lane dim.

    x_ref:    (1, in_ch, seq_t)   VMEM
    emb_ref:  (1, units, 1)       VMEM  f32 (precomputed chce output)
    w1t_ref:  (units, in_ch)      VMEM  W1.T   (f32 or bf16)
    w2t_ref:  (in_ch, units)      VMEM  W2.T   (f32 or bf16)
    o_ref:    (1, in_ch, seq_t)   VMEM
    """
    x = x_ref[0]                                    # (in_ch, seq_t)
    mm_dtype = w1t_ref.dtype
    x_mm = x.astype(mm_dtype)

    # h = relu(W1^T @ x + emb)   -> (units, seq_t), f32 accumulation on the MXU.
    h = jnp.dot(w1t_ref[...], x_mm, preferred_element_type=jnp.float32)
    h = jnp.maximum(h + emb_ref[0].astype(jnp.float32), 0.0)

    # r = W2^T @ h               -> (in_ch, seq_t), f32 accumulation.
    r = jnp.dot(w2t_ref[...], h.astype(mm_dtype),
                preferred_element_type=jnp.float32)

    # Residual add in f32, lane-dense store (seq is the last/lane dim).
    o_ref[0] = (x.astype(jnp.float32) + r).astype(o_ref.dtype)


def _pick_seq_tile(seq):
    if seq % 128 != 0:
        return seq                      # full-extent block (small / ragged seq)
    for t in (1024, 512, 256, 128):
        if seq % t == 0:
            return t
    return seq


def ffn_pallas(inp_ncl, embinp, w1, w2, chce_w, chce_b,
               *, compute_dtype=None, seq_tile=None):
    """inp_ncl: (bs, in_ch, seq); embinp: (bs, embed). Returns (bs, in_ch, seq)."""
    bs, in_ch, seq = inp_ncl.shape
    units = w1.shape[1]

    # chce hoisted out of the kernel: tiny (bs, units) matmul stays in plain XLA.
    emb = (embinp @ chce_w.T + chce_b).astype(jnp.float32).reshape(bs, units, 1)

    # Pre-transpose the (tiny) weights once so both kernel matmuls put seq on lanes.
    w1t = w1.T                                      # (units, in_ch)
    w2t = w2.T                                      # (in_ch, units)
    if compute_dtype is not None:                   # e.g. jnp.bfloat16 on v6e/v7x
        w1t = w1t.astype(compute_dtype)
        w2t = w2t.astype(compute_dtype)

    seq_t = _pick_seq_tile(seq) if seq_tile is None else seq_tile
    assert seq % seq_t == 0, "seq_tile must divide seq"
    grid = (bs, seq // seq_t)

    # TODO(synk): dropout (drop>0) path not implemented (module uses Identity for drop=0).
    return pl.pallas_call(
        ffn_kernel,
        out_shape=jax.ShapeDtypeStruct((bs, in_ch, seq), inp_ncl.dtype),
        grid_spec=pltpu.PrefetchScalarGridSpec(
            num_scalar_prefetch=0,
            grid=grid,
            in_specs=[
                pl.BlockSpec((1, in_ch, seq_t), lambda b, s: (b, 0, s)),
                pl.BlockSpec((1, units, 1),     lambda b, s: (b, 0, 0)),
                pl.BlockSpec((units, in_ch),    lambda b, s: (0, 0)),
                pl.BlockSpec((in_ch, units),    lambda b, s: (0, 0)),
            ],
            out_specs=pl.BlockSpec((1, in_ch, seq_t), lambda b, s: (b, 0, s)),
        ),
        compiler_params=pltpu.CompilerParams(
            dimension_semantics=("parallel", "parallel")),
    )(inp_ncl, emb, w1t, w2t)


def ffn_reference(inp_ncl, embinp, w1, w2, chce_w, chce_b):
    """Pure-JAX reference mirroring the PyTorch forward."""
    emb = (embinp @ chce_w.T + chce_b)[:, :, None]                  # (bs, units, 1)
    resid1 = jax.nn.relu(jnp.einsum('abc,bd->adc', inp_ncl, w1) + emb)
    resid2 = jnp.einsum('abc,bd->adc', resid1, w2)
    return inp_ncl + resid2


if __name__ == "__main__":
    # Small shapes consistent with the module's forward.
    bs, in_ch, seq_len = 2, 32, 256
    units, embed = 64, 32

    key = jax.random.PRNGKey(0)
    k_inp, k_emb, k_w1, k_w2, k_cw, k_cb = jax.random.split(key, 6)

    # Deterministic parameter init mirroring initFFN: std = targ * shps[0] ** (-0.5)
    w1 = jax.random.normal(k_w1, (in_ch, units), jnp.float32) * (1.0 * in_ch ** -0.5)
    w2 = jax.random.normal(k_w2, (units, in_ch), jnp.float32) * (0.1 * units ** -0.5)
    # chce = nn.Linear(embed, units): weight (units, embed), bias (units,)
    chce_w = jax.random.normal(k_cw, (units, embed), jnp.float32) * (embed ** -0.5)
    chce_b = jax.random.normal(k_cb, (units,), jnp.float32) * 0.01

    inp = jax.random.normal(k_inp, (bs, in_ch, seq_len), jnp.float32)
    embinp = jax.random.normal(k_emb, (bs, embed), jnp.float32)

    ref = ffn_reference(inp, embinp, w1, w2, chce_w, chce_b)

    # f32 path, seq tiled to a multiple of 128 (lane-dense stores).
    out = jax.block_until_ready(ffn_pallas(inp, embinp, w1, w2, chce_w, chce_b))
    assert out.shape == (bs, in_ch, seq_len)
    assert jnp.allclose(out, ref, atol=1e-4, rtol=1e-4), "f32 mismatch vs reference"

    # bf16-MXU path (weights bf16, f32 accumulation & f32 residual), looser tolerance.
    out_bf16 = jax.block_until_ready(
        ffn_pallas(inp, embinp, w1, w2, chce_w, chce_b, compute_dtype=jnp.bfloat16))
    assert jnp.allclose(out_bf16, ref, atol=5e-2, rtol=5e-2), "bf16 mismatch vs reference"

    # Small / non-multiple-of-128 seq falls back to a single full-extent seq block.
    inp_small = inp[:, :, :16]
    out_small = jax.block_until_ready(
        ffn_pallas(inp_small, embinp, w1, w2, chce_w, chce_b))
    ref_small = ffn_reference(inp_small, embinp, w1, w2, chce_w, chce_b)
    assert jnp.allclose(out_small, ref_small, atol=1e-4, rtol=1e-4), "small-seq mismatch"

    print("KERNEL_OK")
</pallas_src>

<mosaic_0001>
module attributes {stable_mosaic.version = 11 : i64} {
  func.func @ffn_kernel(%arg0: i32, %arg1: i32, %arg2: memref<1x32x256xf32, #tpu.memory_space<vmem>>, %arg3: memref<1x64x1xf32, #tpu.memory_space<vmem>>, %arg4: memref<64x32xf32, #tpu.memory_space<vmem>>, %arg5: memref<32x64xf32, #tpu.memory_space<vmem>>, %arg6: memref<1x32x256xf32, #tpu.memory_space<vmem>>) attributes {dimension_semantics = [#tpu.dimension_semantics<parallel>, #tpu.dimension_semantics<parallel>], iteration_bounds = array<i64: 2, 1>, scalar_prefetch = 0 : i64, scratch_operands = 0 : i64, tpu.core_type = #tpu.core_type<tc>, window_params = [{transform_indices = @transform_0, window_bounds = array<i64: 1, 32, 256>}, {transform_indices = @transform_1, window_bounds = array<i64: 1, 64, 1>}, {pipeline_mode = #tpu.pipeline_mode<synchronous>, transform_indices = @transform_2, window_bounds = array<i64: 64, 32>}, {pipeline_mode = #tpu.pipeline_mode<synchronous>, transform_indices = @transform_3, window_bounds = array<i64: 32, 64>}, {transform_indices = @transform_4, window_bounds = array<i64: 1, 32, 256>}]} {
    %c0 = arith.constant 0 : index
    %c0_0 = arith.constant 0 : index
    %c0_1 = arith.constant 0 : index
    %0 = vector.load %arg2[%c0, %c0_0, %c0_1] : memref<1x32x256xf32, #tpu.memory_space<vmem>>, vector<1x32x256xf32>
    %1 = vector.shape_cast %0 : vector<1x32x256xf32> to vector<32x256xf32>
    %c0_2 = arith.constant 0 : index
    %c0_3 = arith.constant 0 : index
    %2 = vector.load %arg4[%c0_2, %c0_3] : memref<64x32xf32, #tpu.memory_space<vmem>>, vector<64x32xf32>
    %cst = arith.constant dense<0.000000e+00> : vector<64x256xf32>
    %3 = tpu.matmul %2, %1, %cst {dimension_numbers = #tpu.dot_dimension_numbers<[1], [0], [0], [1], [0, 0, 1, 1], [], []>} : vector<64x32xf32>, vector<32x256xf32>, vector<64x256xf32> -> vector<64x256xf32>
    %c0_4 = arith.constant 0 : index
    %c0_5 = arith.constant 0 : index
    %c0_6 = arith.constant 0 : index
    %4 = vector.load %arg3[%c0_4, %c0_5, %c0_6] : memref<1x64x1xf32, #tpu.memory_space<vmem>>, vector<1x64x1xf32>
    %5 = vector.shape_cast %4 : vector<1x64x1xf32> to vector<64x1xf32>
    %6 = vector.broadcast %5 : vector<64x1xf32> to vector<64x256xf32>
    %7 = arith.addf %3, %6 : vector<64x256xf32>
    %cst_7 = arith.constant 0.000000e+00 : f32
    %8 = vector.broadcast %cst_7 : f32 to vector<64x256xf32>
    %9 = arith.maximumf %7, %8 : vector<64x256xf32>
    %c0_8 = arith.constant 0 : index
    %c0_9 = arith.constant 0 : index
    %10 = vector.load %arg5[%c0_8, %c0_9] : memref<32x64xf32, #tpu.memory_space<vmem>>, vector<32x64xf32>
    %cst_10 = arith.constant dense<0.000000e+00> : vector<32x256xf32>
    %11 = tpu.matmul %10, %9, %cst_10 {dimension_numbers = #tpu.dot_dimension_numbers<[1], [0], [0], [1], [0, 0, 1, 1], [], []>} : vector<32x64xf32>, vector<64x256xf32>, vector<32x256xf32> -> vector<32x256xf32>
    %12 = arith.addf %1, %11 : vector<32x256xf32>
    %c0_11 = arith.constant 0 : index
    %c0_12 = arith.constant 0 : index
    %c0_13 = arith.constant 0 : index
    %13 = vector.load %arg6[%c0_11, %c0_12, %c0_13] : memref<1x32x256xf32, #tpu.memory_space<vmem>>, vector<1x32x256xf32>
    %14 = vector.shape_cast %13 : vector<1x32x256xf32> to vector<32x256xf32>
    %15 = vector.shape_cast %12 : vector<32x256xf32> to vector<1x32x256xf32>
    tpu.vector_store %arg6[%c0_11, %c0_12, %c0_13], %15 {strides = array<i32>} : memref<1x32x256xf32, #tpu.memory_space<vmem>>, vector<1x32x256xf32>,
    return
  }
  func.func @transform_0(%arg0: i32, %arg1: i32) -> (i32, i32, i32) {
    %c0_i32 = arith.constant 0 : i32
    %c0_i32_0 = arith.constant 0 : i32
    return %arg0, %c0_i32, %arg1 : i32, i32, i32
  }
  func.func @transform_1(%arg0: i32, %arg1: i32) -> (i32, i32, i32) {
    %c0_i32 = arith.constant 0 : i32
    %c0_i32_0 = arith.constant 0 : i32
    %c0_i32_1 = arith.constant 0 : i32
    return %arg0, %c0_i32, %c0_i32_0 : i32, i32, i32
  }
  func.func @transform_2(%arg0: i32, %arg1: i32) -> (i32, i32) {
    %c0_i32 = arith.constant 0 : i32
    %c0_i32_0 = arith.constant 0 : i32
    %c0_i32_1 = arith.constant 0 : i32
    return %c0_i32, %c0_i32_0 : i32, i32
  }
  func.func @transform_3(%arg0: i32, %arg1: i32) -> (i32, i32) {
    %c0_i32 = arith.constant 0 : i32
    %c0_i32_0 = arith.constant 0 : i32
    %c0_i32_1 = arith.constant 0 : i32
    return %c0_i32, %c0_i32_0 : i32, i32
  }
  func.func @transform_4(%arg0: i32, %arg1: i32) -> (i32, i32, i32) {
    %c0_i32 = arith.constant 0 : i32
    %c0_i32_0 = arith.constant 0 : i32
    return %arg0, %c0_i32, %arg1 : i32, i32, i32
  }
}

</mosaic_0001>

<llo_original>
// kernel: tpu_custom_call.1
$region0: #{tpu_custom_call.1}
  #allocation0 [shape = 'u32[]', space=smem, size = 0x4, offset = 0x4, fixed_abs, tag = 'smem constant byte address 0x4 - core index']
  #allocation1 [shape = 'u32[144,128]{1,0:T(1,128)}', space=vmem, size = 0x12000, scoped, tag = 'internal scratch']
  %s0 = inlined_call_operand.vmem [shape: f32[2,32,256], index: 0, kind: input, shape index: {}]
  %s1 = inlined_call_operand.vmem [shape: f32[2,64,1], index: 1, kind: input, shape index: {}]
  %s2 = inlined_call_operand.vmem [shape: f32[64,32], index: 2, kind: input, shape index: {}]
  %s3 = inlined_call_operand.vmem [shape: f32[32,64], index: 3, kind: input, shape index: {}]
  %s4 = inlined_call_operand.hbm [shape: f32[2,32,256], index: 4, kind: output, shape index: {}]
  %s5 = sld [smem:[#allocation0]]
  $region49: #{tpu_custom_call.1} parent=0
    _
  %s7 = ssub.s32 1, %s5
  %s8 = scalar_select 0, %s7, %s5
  $region1: #{tpu_custom_call.1} parent=0
    #allocation2 [shape = 'u8[65536]{0}', space=vmem, size = 0x10000, scoped, tag = 'output window, operand 0']
    #allocation3 [shape = 's32[2]{0}', space=sflag, size = 0x8, scoped, tag = 'scoped memory for tpu_custom_call.1']
    %9 = vsyncpa [#allocation3], 0
    %s10 = scalar_lea.sflag [#allocation3], 1
    %11 = vsyncpa %s10, 0
    loop: start=0, step=1, limit=4
    $region2: #{tpu_custom_call.1} parent=1 // loop_pre_header
      _
    $region3: #{tpu_custom_call.1} parent=1 // loop_header
      %s13 = sphi 0, %s17
      %p14 = scmp.ge.s32.totalorder %s13, 4
      %s20 = sphi 0, %s32
      %s21 = sphi 0, %s28
      %s22 = sphi 0, %s20
      %s23 = sphi 0, %s21
      %s24 = sphi 0, %s22
      %s25 = sphi 0, %s23
      %s37 = sphi 0, %s39
      %s40 = sphi 0, %s37
      %s41 = sphi 0, %s40
      %s57 = sphi 0, %s41
      %s63 = sphi 0, %s65
      %s66 = sphi 0, %s63
      %s67 = sphi 0, %s66
      %s83 = sphi 0, %s67
      %s87 = sphi 0, %s87
      %s89 = sphi 0, %s87
      %s90 = sphi 0, %s89
      %s104 = sphi 0, %s90
      %s108 = sphi 0, %s108
      %s110 = sphi 0, %s108
      %s111 = sphi 0, %s110
      %s125 = sphi 0, %s111
      %s133 = sphi 0, %s135
      %s136 = sphi 0, %s133
      %s137 = sphi 0, %s136
      %s153 = sphi 0, %s137
    $region4: #{tpu_custom_call.1} parent=1 // loop_header_branch
      %16 = sbr.rel (%p14) target = $region8
    $region5: #{tpu_custom_call.1} parent=1 // loop_body
      %s18 = ssub.s32 %s13, 1
      %s19 = ssub.s32 %s13, 2
      %s26 = sadd.s32 1, %s21
      %p27 = scmp.ge.s32.totalorder %s26, 1
      %s28 = scalar_select %p27, 0, %s26
      %s29 = sadd.s32 1, %s20
      %s30 = scalar_select %p27, %s29, %s20
      %p31 = scmp.ge.s32.totalorder %s30, 2
      %s32 = scalar_select %p31, 0, %s30
      %s33 = ssub.s32 %s20, %s32
      %s34 = ssub.s32 %s21, %s28
      %s35 = sor.u32 %s33, %s34
      %p36 = scmp.eq.s32.totalorder %s35, 0
      %s38 = sadd.s32 %s37, 1
      %s39 = scalar_select %p36, %s37, %s38
      %p42 = pneg %p36
      %p43 = scmp.eq.s32.totalorder %s13, 1
      %p44 = por %p42, %p43
      %p45 = scmp.ne.s32.totalorder %s37, %s40
      %p46 = scmp.eq.s32.totalorder %s13, 0
      %p47 = por %p45, %p46
      %p48 = scmp.ne.s32.totalorder %s37, %s40
      %p49 = scmp.eq.s32.totalorder %s18, 1
      %p50 = por %p48, %p49
      %p51 = scmp.ne.s32.totalorder %s40, %s41
      %p52 = scmp.eq.s32.totalorder %s18, 0
      %p53 = por %p51, %p52
      %p54 = scmp.ne.s32.totalorder %s40, %s41
      %p55 = scmp.eq.s32.totalorder %s19, 1
      %p56 = por %p54, %p55
      %p58 = scmp.ne.s32.totalorder %s41, %s57
      %p59 = scmp.eq.s32.totalorder %s19, 0
      %p60 = por %p58, %p59
      %s61 = ssub.s32 %s20, %s32
      %p62 = scmp.eq.s32.totalorder %s61, 0
      %s64 = sadd.s32 %s63, 1
      %s65 = scalar_select %p62, %s63, %s64
      %p68 = pneg %p62
      %p69 = scmp.eq.s32.totalorder %s13, 1
      %p70 = por %p68, %p69
      %p71 = scmp.ne.s32.totalorder %s63, %s66
      %p72 = scmp.eq.s32.totalorder %s13, 0
      %p73 = por %p71, %p72
      %p74 = scmp.ne.s32.totalorder %s63, %s66
      %p75 = scmp.eq.s32.totalorder %s18, 1
      %p76 = por %p74, %p75
      %p77 = scmp.ne.s32.totalorder %s66, %s67
      %p78 = scmp.eq.s32.totalorder %s18, 0
      %p79 = por %p77, %p78
      %p80 = scmp.ne.s32.totalorder %s66, %s67
      %p81 = scmp.eq.s32.totalorder %s19, 1
      %p82 = por %p80, %p81
      %p84 = scmp.ne.s32.totalorder %s67, %s83
      %p85 = scmp.eq.s32.totalorder %s19, 0
      %p86 = por %p84, %p85
      %s88 = sadd.s32 %s87, 1
      %p91 = scmp.eq.s32.totalorder %s13, 1
      %p92 = scmp.ne.s32.totalorder %s87, %s89
      %p93 = scmp.eq.s32.totalorder %s13, 0
      %p94 = por %p92, %p93
      %p95 = scmp.ne.s32.totalorder %s87, %s89
      %p96 = scmp.eq.s32.totalorder %s18, 1
      %p97 = por %p95, %p96
      %p98 = scmp.ne.s32.totalorder %s89, %s90
      %p99 = scmp.eq.s32.totalorder %s18, 0
      %p100 = por %p98, %p99
      %p101 = scmp.ne.s32.totalorder %s89, %s90
      %p102 = scmp.eq.s32.totalorder %s19, 1
      %p103 = por %p101, %p102
      %p105 = scmp.ne.s32.totalorder %s90, %s104
      %p106 = scmp.eq.s32.totalorder %s19, 0
      %p107 = por %p105, %p106
      %s109 = sadd.s32 %s108, 1
      %p112 = scmp.eq.s32.totalorder %s13, 1
      %p113 = scmp.ne.s32.totalorder %s108, %s110
      %p114 = scmp.eq.s32.totalorder %s13, 0
      %p115 = por %p113, %p114
      %p116 = scmp.ne.s32.totalorder %s108, %s110
      %p117 = scmp.eq.s32.totalorder %s18, 1
      %p118 = por %p116, %p117
      %p119 = scmp.ne.s32.totalorder %s110, %s111
      %p120 = scmp.eq.s32.totalorder %s18, 0
      %p121 = por %p119, %p120
      %p122 = scmp.ne.s32.totalorder %s110, %s111
      %p123 = scmp.eq.s32.totalorder %s19, 1
      %p124 = por %p122, %p123
      %p126 = scmp.ne.s32.totalorder %s111, %s125
      %p127 = scmp.eq.s32.totalorder %s19, 0
      %p128 = por %p126, %p127
      %s129 = ssub.s32 %s20, %s32
      %s130 = ssub.s32 %s21, %s28
      %s131 = sor.u32 %s129, %s130
      %p132 = scmp.eq.s32.totalorder %s131, 0
      %s134 = sadd.s32 %s133, 1
      %s135 = scalar_select %p132, %s133, %s134
      %p138 = pneg %p132
      %p139 = scmp.eq.s32.totalorder %s13, 1
      %p140 = por %p138, %p139
      %p141 = scmp.ne.s32.totalorder %s133, %s136
      %p142 = scmp.eq.s32.totalorder %s13, 0
      %p143 = por %p141, %p142
      %p144 = scmp.ne.s32.totalorder %s133, %s136
      %p145 = scmp.eq.s32.totalorder %s18, 1
      %p146 = por %p144, %p145
      %p147 = scmp.ne.s32.totalorder %s136, %s137
      %p148 = scmp.eq.s32.totalorder %s18, 0
      %p149 = por %p147, %p148
      %p150 = scmp.ne.s32.totalorder %s136, %s137
      %p151 = scmp.eq.s32.totalorder %s19, 1
      %p152 = por %p150, %p151
      %p154 = scmp.ne.s32.totalorder %s137, %s153
      %p155 = scmp.eq.s32.totalorder %s19, 0
      %p156 = por %p154, %p155
      %p157 = scmp.le.s32.totalorder 1, %s13
      %p158 = scmp.lt.s32.totalorder %s13, 3
      %p159 = pnand %p157, %p158
      %p160 = pneg %p159
      // Predicated region
      $region9: #{tpu_custom_call.1} parent=5 // pred_check
        _
      $region10: #{tpu_custom_call.1} parent=5 // pred_check_branch
        %162 = sbr.rel (%p159) target = $region12
      $region11: #{tpu_custom_call.1} parent=5 // pred_region
        %s163 = ssub.s32 %s13, 1
        // Predicated region
        $region13: #{tpu_custom_call.1} parent=11 // pred_check
          %p164 = pneg %p100
        $region14: #{tpu_custom_call.1} parent=11 // pred_check_branch
          %166 = sbr.rel (%p164) target = $region16
        $region15: #{tpu_custom_call.1} parent=11 // pred_region
          _
        $region16: #{tpu_custom_call.1} parent=11 // pred_fallthru
          _
        // Predicated region
        $region17: #{tpu_custom_call.1} parent=11 // pred_check
          %p167 = pneg %p121
        $region18: #{tpu_custom_call.1} parent=11 // pred_check_branch
          %169 = sbr.rel (%p167) target = $region20
        $region19: #{tpu_custom_call.1} parent=11 // pred_region
          _
        $region20: #{tpu_custom_call.1} parent=11 // pred_fallthru
          _
      $region12: #{tpu_custom_call.1} parent=5 // pred_fallthru
        _
      %p170 = scmp.lt.s32.totalorder %s13, 2
      // Predicated region
      $region21: #{tpu_custom_call.1} parent=5 // pred_check
        %p171 = pneg %p170
      $region22: #{tpu_custom_call.1} parent=5 // pred_check_branch
        %173 = sbr.rel (%p171) target = $region24
      $region23: #{tpu_custom_call.1} parent=5 // pred_region
        // Predicated region
        $region25: #{tpu_custom_call.1} parent=23 // pred_check
          %p174 = pneg %p47
        $region26: #{tpu_custom_call.1} parent=23 // pred_check_branch
          %176 = sbr.rel (%p174) target = $region28
        $region27: #{tpu_custom_call.1} parent=23 // pred_region
          %s177 = smul.u32 2, %s21
          %p178 = scmp.lt.s32.totalorder %s20, 1
          %s179 = scalar_select %p178, %s20, 1
          %p180 = scmp.lt.s32.totalorder %s177, 1
          %s181 = scalar_select %p180, %s177, 1
          %s182 = smul.addr %s179, 8
          %s183 = sadd.s32 %s181, %s182
          %s184 = smul.addr %s183, 8
          %s185 = scalar_lea.vmem %s0, %s184
          %s186 = smul.u32 2, %s21
        $region28: #{tpu_custom_call.1} parent=23 // pred_fallthru
          _
        // Predicated region
        $region29: #{tpu_custom_call.1} parent=23 // pred_check
          %p187 = pneg %p73
        $region30: #{tpu_custom_call.1} parent=23 // pred_check_branch
          %189 = sbr.rel (%p187) target = $region32
        $region31: #{tpu_custom_call.1} parent=23 // pred_region
          %p190 = scmp.lt.s32.totalorder %s20, 1
          %s191 = scalar_select %p190, %s20, 1
          %s192 = smul.addr %s191, 8
          %s193 = smul.addr %s192, 8
          %s194 = scalar_lea.vmem %s1, %s193
        $region32: #{tpu_custom_call.1} parent=23 // pred_fallthru
          _
      $region24: #{tpu_custom_call.1} parent=5 // pred_fallthru
        _
      %p195 = scmp.le.s32.totalorder 1, %s13
      %p196 = scmp.lt.s32.totalorder %s13, 3
      %p197 = pnand %p195, %p196
      %p198 = pneg %p197
      // Predicated region
      $region33: #{tpu_custom_call.1} parent=5 // pred_check
        _
      $region34: #{tpu_custom_call.1} parent=5 // pred_check_branch
        %200 = sbr.rel (%p197) target = $region36
      $region35: #{tpu_custom_call.1} parent=5 // pred_region
        %s201 = ssub.s32 %s13, 1
        %s202 = smul.u32 2, %s23
        %p203 = scmp.lt.s32.totalorder %s22, 1
        %s204 = scalar_select %p203, %s22, 1
        %p205 = scmp.lt.s32.totalorder %s202, 1
        %s206 = scalar_select %p205, %s202, 1
        %s207 = smul.addr %s204, 8
        %s208 = sadd.s32 %s206, %s207
        %s209 = smul.addr %s208, 8
        %s210 = scalar_lea.vmem %s0, %s209
        %p211 = pneg %p53
        %p212 = pneg %p50
        %p213 = scmp.lt.s32.totalorder %s22, 1
        %s214 = scalar_select %p213, %s22, 1
        %s215 = smul.addr %s214, 8
        %s216 = smul.addr %s215, 8
        %s217 = scalar_lea.vmem %s1, %s216
        %p218 = pneg %p79
        %p219 = pneg %p76
        %p220 = pneg %p100
        %p221 = pneg %p97
        %p222 = pneg %p121
        %p223 = pneg %p118
        %p224 = pneg %p149
        %p225 = pneg %p146
        %s226 = sand.u32 %s136, 1
        %s227 = scalar_lea.sflag [#allocation3], %s226
        %s228 = sand.u32 %s136, 1
        %s229 = smul.addr %s228, 64
        %s230 = scalar_lea.vmem [#allocation2], %s229
        %s231 = smul.u32 2, %s23
        %p232 = scmp.lt.s32.totalorder %s22, 1
        %s233 = scalar_select %p232, %s22, 1
        %p234 = scmp.lt.s32.totalorder %s231, 1
        %s235 = scalar_select %p234, %s231, 1
        %s236 = smul.addr %s233, 8
        %s237 = sadd.s32 %s235, %s236
        %s238 = smul.addr %s237, 8
        %s239 = scalar_lea.vmem %s0, %s238
        %s240 = smul.u32 2, %s23
        %p241 = scmp.lt.s32.totalorder %s22, 1
        %s242 = scalar_select %p241, %s22, 1
        %s243 = smul.addr %s242, 8
        %s244 = smul.addr %s243, 8
        %s245 = scalar_lea.vmem %s1, %s244
        %s246 = smul.u32 2, %s23
        %v247 = vld [vmem:[%s239] sm:$0xff]
        %v248 = vld [vmem:[%s239 + $0x8] sm:$0xff]
        %v249 = vld [vmem:[%s239 + $0x10] sm:$0xff]
        %v250 = vld [vmem:[%s239 + $0x18] sm:$0xff]
        %v251 = vld [vmem:[%s239 + $0x20] sm:$0xff]
        %v252 = vld [vmem:[%s239 + $0x28] sm:$0xff]
        %v253 = vld [vmem:[%s239 + $0x30] sm:$0xff]
        %v254 = vld [vmem:[%s239 + $0x38] sm:$0xff]
        %v255 = vld [vmem:[%s2] sm:$0xff]
        %v256 = vld [vmem:[%s2 + $0x8] sm:$0xff]
        %v257 = vld [vmem:[%s2 + $0x10] sm:$0xff]
        %v258 = vld [vmem:[%s2 + $0x18] sm:$0xff]
        %v259 = vld [vmem:[%s2 + $0x20] sm:$0xff]
        %v260 = vld [vmem:[%s2 + $0x28] sm:$0xff]
        %v261 = vld [vmem:[%s2 + $0x30] sm:$0xff]
        %v262 = vld [vmem:[%s2 + $0x38] sm:$0xff]
        %v263 = vld [vmem:[%s245] sm:$0xff]
        %v264 = vld [vmem:[%s245 + $0x8] sm:$0xff]
        %v265 = vld [vmem:[%s245 + $0x10] sm:$0xff]
        %v266 = vld [vmem:[%s245 + $0x18] sm:$0xff]
        %v267 = vld [vmem:[%s245 + $0x20] sm:$0xff]
        %v268 = vld [vmem:[%s245 + $0x28] sm:$0xff]
        %v269 = vld [vmem:[%s245 + $0x30] sm:$0xff]
        %v270 = vld [vmem:[%s245 + $0x38] sm:$0xff]
        %272 = vset.pattern.permute.xlu0 0
        %273 = vperm.xlu0 %272, %v263
        %v274 = vpop.permute.xlu0 %273
        %277 = vset.pattern.permute.xlu0 0
        %278 = vperm.xlu0 %277, %v264
        %v279 = vpop.permute.xlu0 %278
        %282 = vset.pattern.permute.xlu0 0
        %283 = vperm.xlu0 %282, %v265
        %v284 = vpop.permute.xlu0 %283
        %287 = vset.pattern.permute.xlu0 0
        %288 = vperm.xlu0 %287, %v266
        %v289 = vpop.permute.xlu0 %288
        %292 = vset.pattern.permute.xlu0 0
        %293 = vperm.xlu0 %292, %v267
        %v294 = vpop.permute.xlu0 %293
        %297 = vset.pattern.permute.xlu0 0
        %298 = vperm.xlu0 %297, %v268
        %v299 = vpop.permute.xlu0 %298
        %302 = vset.pattern.permute.xlu0 0
        %303 = vperm.xlu0 %302, %v269
        %v304 = vpop.permute.xlu0 %303
        %307 = vset.pattern.permute.xlu0 0
        %308 = vperm.xlu0 %307, %v270
        %v309 = vpop.permute.xlu0 %308
        %vm311 = vcmask 261120
        %v313 = vsel %vm311, %v255, 0
        %v316 = vsel %vm311, %v256, 0
        %v319 = vsel %vm311, %v257, 0
        %v322 = vsel %vm311, %v258, 0
        %v325 = vsel %vm311, %v259, 0
        %v328 = vsel %vm311, %v260, 0
        %v331 = vsel %vm311, %v261, 0
        %v334 = vsel %vm311, %v262, 0
        %336 = vmatprep.subr.mxu0 %v248
        %337 = vmatpush1.msra.mxu0 %v247
        %338 = vmatprep.subr.mxu0 %v250
        %339 = vmatpush1.msra.mxu0 %v249
        %340 = vmatprep.subr.mxu0 %v252
        %341 = vmatpush1.msra.mxu0 %v251
        %342 = vmatprep.subr.mxu0 %v254
        %343 = vmatpush1.msra.mxu0 %v253
        %344 = vmatprep.subr.mxu0 0.0
        %345 = vmatpush1.msra.mxu0 0.0
        %346 = vmatprep.subr.mxu0 0.0
        %347 = vmatpush1.msra.mxu0 0.0
        %348 = vmatprep.subr.mxu0 0.0
        %349 = vmatpush1.msra.mxu0 0.0
        %350 = vmatprep.subr.mxu0 0.0
        %351 = vmatpush1.msra.mxu0 0.0
        %352 = vmatprep.subr.mxu0 0.0
        %353 = vmatpush1.msra.mxu0 0.0
        %354 = vmatprep.subr.mxu0 0.0
        %355 = vmatpush1.msra.mxu0 0.0
        %356 = vmatprep.subr.mxu0 0.0
        %357 = vmatpush1.msra.mxu0 0.0
        %358 = vmatprep.subr.mxu0 0.0
        %359 = vmatpush1.msra.mxu0 0.0
        %360 = vmatprep.subr.mxu0 0.0
        %361 = vmatpush1.msra.mxu0 0.0
        %362 = vmatprep.subr.mxu0 0.0
        %363 = vmatpush1.msra.mxu0 0.0
        %364 = vmatprep.subr.mxu0 0.0
        %365 = vmatpush1.msra.mxu0 0.0
        %366 = vmatprep.subr.mxu0 0.0
        %367 = vmatpush1.msra.mxu0 0.0
        %368 = vmatprep.subr.mxu0 0.0
        %369 = vmatpush1.msra.mxu0 0.0
        %370 = vmatprep.subr.mxu0 0.0
        %371 = vmatpush1.msra.mxu0 0.0
        %372 = vmatprep.subr.mxu0 0.0
        %373 = vmatpush1.msra.mxu0 0.0
        %374 = vmatprep.subr.mxu0 0.0
        %375 = vmatpush1.msra.mxu0 0.0
        %376 = vmatprep.subr.mxu0 0.0
        %377 = vmatpush1.msra.mxu0 0.0
        %378 = vmatprep.subr.mxu0 0.0
        %379 = vmatpush1.msra.mxu0 0.0
        %380 = vmatprep.subr.mxu0 0.0
        %381 = vmatpush1.msra.mxu0 0.0
        %382 = vmatprep.subr.mxu0 0.0
        %383 = vmatpush1.msra.mxu0 0.0
        %384 = vmatprep.subr.mxu0 0.0
        %385 = vmatpush1.msra.mxu0 0.0
        %386 = vmatprep.subr.mxu0 0.0
        %387 = vmatpush1.msra.mxu0 0.0
        %388 = vmatprep.subr.mxu0 0.0
        %389 = vmatpush1.msra.mxu0 0.0
        %390 = vmatprep.subr.mxu0 0.0
        %391 = vmatpush1.msra.mxu0 0.0
        %392 = vmatprep.subr.mxu0 0.0
        %393 = vmatpush1.msra.mxu0 0.0
        %394 = vmatprep.subr.mxu0 0.0
        %395 = vmatpush1.msra.mxu0 0.0
        %396 = vmatprep.subr.mxu0 0.0
        %397 = vmatpush1.msra.mxu0 0.0
        %398 = vmatprep.subr.mxu0 0.0
        %399 = vmatpush1.msra.mxu0 0.0
        %400 = vmatprep.mubr.f32.mxu0 0.0
        %401 = vmatmul.mubr.f32.gmra.mrb[0].mxu0 %v313
        %v402 = vpop.f32.mrb[0].mxu0
        %v403 = vadd.f32 %v274, %v402
        %v404 = vpop.f32.mrb[0].mxu0
        %v405 = vadd.f32 %v274, %v404
        %406 = vmatprep.mubr.f32.mxu0 0.0
        %407 = vmatmul.mubr.f32.gmra.mrb[0].mxu0 %v316
        %v408 = vpop.f32.mrb[0].mxu0
        %v409 = vadd.f32 %v279, %v408
        %v410 = vpop.f32.mrb[0].mxu0
        %v411 = vadd.f32 %v279, %v410
        %412 = vmatprep.mubr.f32.mxu0 0.0
        %413 = vmatmul.mubr.f32.gmra.mrb[0].mxu0 %v319
        %v414 = vpop.f32.mrb[0].mxu0
        %v415 = vadd.f32 %v284, %v414
        %v416 = vpop.f32.mrb[0].mxu0
        %v417 = vadd.f32 %v284, %v416
        %418 = vmatprep.mubr.f32.mxu0 0.0
        %419 = vmatmul.mubr.f32.gmra.mrb[0].mxu0 %v322
        %v420 = vpop.f32.mrb[0].mxu0
        %v421 = vadd.f32 %v289, %v420
        %v422 = vpop.f32.mrb[0].mxu0
        %v423 = vadd.f32 %v289, %v422
        %424 = vmatprep.mubr.f32.mxu0 0.0
        %425 = vmatmul.mubr.f32.gmra.mrb[0].mxu0 %v325
        %v426 = vpop.f32.mrb[0].mxu0
        %v427 = vadd.f32 %v294, %v426
        %v428 = vpop.f32.mrb[0].mxu0
        %v429 = vadd.f32 %v294, %v428
        %430 = vmatprep.mubr.f32.mxu0 0.0
        %431 = vmatmul.mubr.f32.gmra.mrb[0].mxu0 %v328
        %v432 = vpop.f32.mrb[0].mxu0
        %v433 = vadd.f32 %v299, %v432
        %v434 = vpop.f32.mrb[0].mxu0
        %v435 = vadd.f32 %v299, %v434
        %436 = vmatprep.mubr.f32.mxu0 0.0
        %437 = vmatmul.mubr.f32.gmra.mrb[0].mxu0 %v331
        %v438 = vpop.f32.mrb[0].mxu0
        %v439 = vadd.f32 %v304, %v438
        %v440 = vpop.f32.mrb[0].mxu0
        %v441 = vadd.f32 %v304, %v440
        %442 = vmatprep.mubr.f32.mxu0 0.0
        %443 = vmatmul.mubr.f32.gmra.mrb[0].mxu0 %v334
        %v444 = vpop.f32.mrb[0].mxu0
        %v445 = vadd.f32 %v309, %v444
        %v446 = vpop.f32.mrb[0].mxu0
        %v447 = vadd.f32 %v309, %v446
        %448 = vdwg.mxu0
        %v449 = vmax.f32 %v403, 0.0
        %v450 = vmax.f32 %v405, 0.0
        %v451 = vmax.f32 %v409, 0.0
        %v452 = vmax.f32 %v411, 0.0
        %v453 = vmax.f32 %v415, 0.0
        %v454 = vmax.f32 %v417, 0.0
        %v455 = vmax.f32 %v421, 0.0
        %v456 = vmax.f32 %v423, 0.0
        %v457 = vmax.f32 %v427, 0.0
        %v458 = vmax.f32 %v429, 0.0
        %v459 = vmax.f32 %v433, 0.0
        %v460 = vmax.f32 %v435, 0.0
        %v461 = vmax.f32 %v439, 0.0
        %v462 = vmax.f32 %v441, 0.0
        %v463 = vmax.f32 %v445, 0.0
        %v464 = vmax.f32 %v447, 0.0
        %v465 = vld [vmem:[%s3] sm:$0xff]
        %v466 = vld [vmem:[%s3 + $0x8] sm:$0xff]
        %v467 = vld [vmem:[%s3 + $0x10] sm:$0xff]
        %v468 = vld [vmem:[%s3 + $0x18] sm:$0xff]
        %vm469 = vcmask 523264
        %v471 = vsel %vm469, %v465, 0
        %v474 = vsel %vm469, %v466, 0
        %v477 = vsel %vm469, %v467, 0
        %v480 = vsel %vm469, %v468, 0
        %482 = vmatprep.subr.mxu0 %v450
        %483 = vmatpush1.msra.mxu0 %v449
        %484 = vmatprep.subr.mxu0 %v452
        %485 = vmatpush1.msra.mxu0 %v451
        %486 = vmatprep.subr.mxu0 %v454
        %487 = vmatpush1.msra.mxu0 %v453
        %488 = vmatprep.subr.mxu0 %v456
        %489 = vmatpush1.msra.mxu0 %v455
        %490 = vmatprep.subr.mxu0 %v458
        %491 = vmatpush1.msra.mxu0 %v457
        %492 = vmatprep.subr.mxu0 %v460
        %493 = vmatpush1.msra.mxu0 %v459
        %494 = vmatprep.subr.mxu0 %v462
        %495 = vmatpush1.msra.mxu0 %v461
        %496 = vmatprep.subr.mxu0 %v464
        %497 = vmatpush1.msra.mxu0 %v463
        %498 = vmatprep.subr.mxu0 0.0
        %499 = vmatpush1.msra.mxu0 0.0
        %500 = vmatprep.subr.mxu0 0.0
        %501 = vmatpush1.msra.mxu0 0.0
        %502 = vmatprep.subr.mxu0 0.0
        %503 = vmatpush1.msra.mxu0 0.0
        %504 = vmatprep.subr.mxu0 0.0
        %505 = vmatpush1.msra.mxu0 0.0
        %506 = vmatprep.subr.mxu0 0.0
        %507 = vmatpush1.msra.mxu0 0.0
        %508 = vmatprep.subr.mxu0 0.0
        %509 = vmatpush1.msra.mxu0 0.0
        %510 = vmatprep.subr.mxu0 0.0
        %511 = vmatpush1.msra.mxu0 0.0
        %512 = vmatprep.subr.mxu0 0.0
        %513 = vmatpush1.msra.mxu0 0.0
        %514 = vmatprep.subr.mxu0 0.0
        %515 = vmatpush1.msra.mxu0 0.0
        %516 = vmatprep.subr.mxu0 0.0
        %517 = vmatpush1.msra.mxu0 0.0
        %518 = vmatprep.subr.mxu0 0.0
        %519 = vmatpush1.msra.mxu0 0.0
        %520 = vmatprep.subr.mxu0 0.0
        %521 = vmatpush1.msra.mxu0 0.0
        %522 = vmatprep.subr.mxu0 0.0
        %523 = vmatpush1.msra.mxu0 0.0
        %524 = vmatprep.subr.mxu0 0.0
        %525 = vmatpush1.msra.mxu0 0.0
        %526 = vmatprep.subr.mxu0 0.0
        %527 = vmatpush1.msra.mxu0 0.0
        %528 = vmatprep.subr.mxu0 0.0
        %529 = vmatpush1.msra.mxu0 0.0
        %530 = vmatprep.subr.mxu0 0.0
        %531 = vmatpush1.msra.mxu0 0.0
        %532 = vmatprep.subr.mxu0 0.0
        %533 = vmatpush1.msra.mxu0 0.0
        %534 = vmatprep.subr.mxu0 0.0
        %535 = vmatpush1.msra.mxu0 0.0
        %536 = vmatprep.subr.mxu0 0.0
        %537 = vmatpush1.msra.mxu0 0.0
        %538 = vmatprep.subr.mxu0 0.0
        %539 = vmatpush1.msra.mxu0 0.0
        %540 = vmatprep.subr.mxu0 0.0
        %541 = vmatpush1.msra.mxu0 0.0
        %542 = vmatprep.subr.mxu0 0.0
        %543 = vmatpush1.msra.mxu0 0.0
        %544 = vmatprep.subr.mxu0 0.0
        %545 = vmatpush1.msra.mxu0 0.0
        %546 = vmatprep.mubr.f32.mxu0 0.0
        %547 = vmatmul.mubr.f32.gmra.mrb[0].mxu0 %v471
        %v548 = vpop.f32.mrb[0].mxu0
        %v549 = vadd.f32 0.0, %v548
        %v550 = vpop.f32.mrb[0].mxu0
        %v551 = vadd.f32 0.0, %v550
        %552 = vmatprep.mubr.f32.mxu0 0.0
        %553 = vmatmul.mubr.f32.gmra.mrb[0].mxu0 %v474
        %v554 = vpop.f32.mrb[0].mxu0
        %v555 = vadd.f32 0.0, %v554
        %v556 = vpop.f32.mrb[0].mxu0
        %v557 = vadd.f32 0.0, %v556
        %558 = vmatprep.mubr.f32.mxu0 0.0
        %559 = vmatmul.mubr.f32.gmra.mrb[0].mxu0 %v477
        %v560 = vpop.f32.mrb[0].mxu0
        %v561 = vadd.f32 0.0, %v560
        %v562 = vpop.f32.mrb[0].mxu0
        %v563 = vadd.f32 0.0, %v562
        %564 = vmatprep.mubr.f32.mxu0 0.0
        %565 = vmatmul.mubr.f32.gmra.mrb[0].mxu0 %v480
        %v566 = vpop.f32.mrb[0].mxu0
        %v567 = vadd.f32 0.0, %v566
        %v568 = vpop.f32.mrb[0].mxu0
        %v569 = vadd.f32 0.0, %v568
        %570 = vdwg.mxu0
        %v571 = vadd.f32 %v247, %v549
        %v572 = vadd.f32 %v248, %v551
        %v573 = vadd.f32 %v249, %v555
        %v574 = vadd.f32 %v250, %v557
        %v575 = vadd.f32 %v251, %v561
        %v576 = vadd.f32 %v252, %v563
        %v577 = vadd.f32 %v253, %v567
        %v578 = vadd.f32 %v254, %v569
        %579 = vst [vmem:[%s230] sm:$0xff] %v571
        %580 = vst [vmem:[%s230 + $0x8] sm:$0xff] %v572
        %581 = vst [vmem:[%s230 + $0x10] sm:$0xff] %v573
        %582 = vst [vmem:[%s230 + $0x18] sm:$0xff] %v574
        %583 = vst [vmem:[%s230 + $0x20] sm:$0xff] %v575
        %584 = vst [vmem:[%s230 + $0x28] sm:$0xff] %v576
        %585 = vst [vmem:[%s230 + $0x30] sm:$0xff] %v577
        %586 = vst [vmem:[%s230 + $0x38] sm:$0xff] %v578
        %s587 = sand.u32 %s136, 1
        %s588 = scalar_lea.sflag [#allocation3], %s587
        %s589 = sand.u32 %s136, 1
        %s590 = smul.addr %s589, 64
        %s591 = scalar_lea.vmem [#allocation2], %s590
        // Predicated region
        $region37: #{tpu_custom_call.1} parent=35 // pred_check
          %p592 = pneg %p146
        $region38: #{tpu_custom_call.1} parent=35 // pred_check_branch
          %594 = sbr.rel (%p592) target = $region40
        $region39: #{tpu_custom_call.1} parent=35 // pred_region
          %s595 = smul.u32 2, %s23
          %s597 = ssub.s32 1024, 1024
          %598 = vsyncadd %s588, %s597
          %s599 = smul.addr %s22, 8
          %s600 = sadd.s32 %s595, %s599
          %s601 = smul.addr %s600, 128
          %s602 = scalar_lea.hbm %s4, %s601
          %s603 = sshll.u32 %s591, 4
          %s604 = int_to_ptr.vmem [resolvable:$true] %s603
          %609 = dma.vmem_to_hbm [thread:$0]  %s604, 1024, %s602, %s588, 256, 256, 16
        $region40: #{tpu_custom_call.1} parent=35 // pred_fallthru
          _
      $region36: #{tpu_custom_call.1} parent=5 // pred_fallthru
        _
      %p610 = scmp.le.s32.totalorder 2, %s13
      // Predicated region
      $region41: #{tpu_custom_call.1} parent=5 // pred_check
        %p611 = pneg %p610
      $region42: #{tpu_custom_call.1} parent=5 // pred_check_branch
        %613 = sbr.rel (%p611) target = $region44
      $region43: #{tpu_custom_call.1} parent=5 // pred_region
        %s614 = ssub.s32 %s13, 2
        // Predicated region
        $region45: #{tpu_custom_call.1} parent=43 // pred_check
          %p615 = pneg %p152
        $region46: #{tpu_custom_call.1} parent=43 // pred_check_branch
          %617 = sbr.rel (%p615) target = $region48
        $region47: #{tpu_custom_call.1} parent=43 // pred_region
          %s618 = sand.u32 %s137, 1
          %s619 = scalar_lea.sflag [#allocation3], %s618
          %s620 = sand.u32 %s137, 1
          %s621 = smul.addr %s620, 64
          %s622 = scalar_lea.vmem [#allocation2], %s621
          %623 = dma.done %s619, 1024
        $region48: #{tpu_custom_call.1} parent=43 // pred_fallthru
          _
      $region44: #{tpu_custom_call.1} parent=5 // pred_fallthru
        _
    $region6: #{tpu_custom_call.1} parent=1 // loop_footer
      %s17 = sadd.s32 1, %s13
    $region7: #{tpu_custom_call.1} parent=1 // loop_footer_branch
      %12 = sbr.rel target = $region3
    $region8: #{tpu_custom_call.1} parent=1 // loop_exit
      _
    %624 = vsyncpa [#allocation3], 1
    %s625 = scalar_lea.sflag [#allocation3], 1
    %626 = vsyncpa %s625, 1

</llo_original>
